<compile_context>
chip_gen: v5e
topology: v5e:2x2
jax: 0.10.0
libtpu: 0.0.40
codegen_flags: <defaults>
</compile_context>

<pallas_src>
import functools

import jax
import jax.numpy as jnp
from jax.experimental import pallas as pl
from jax.experimental.pallas import tpu as pltpu


def _mlp_kernel(x_ref, w1_ref, b1_ref, w2_ref, b2_ref, w3_ref, b3_ref, o_ref):
    """Fused forward for one batch tile:
         h1 = tanh(x @ W1 + b1)      (VPU, f32 — K is tiny)
         h2 = tanh(h1 @ W2 + b2)     (MXU, bf16 in / f32 acc)
         o  = (h2 @ W3 + b3)[:, :out_cols]   (MXU; narrow store)
    """
    mxu_dtype = w2_ref.dtype
    input_dim = x_ref.shape[-1]
    out_cols = o_ref.shape[-1]

    # ---- Layer 1 on the VPU: K = input_dim (e.g. 4) would waste >97% of the MXU.
    x = x_ref[...]                                            # (T, input_dim) f32
    h1_pre = b1_ref[...] + x[:, 0:1] * w1_ref[0:1, :]         # (T, H) f32
    for k in range(1, input_dim):                             # static unroll
        h1_pre = h1_pre + x[:, k:k + 1] * w1_ref[k:k + 1, :]
    h1 = jnp.tanh(h1_pre)                                     # f32 (EUP)

    # ---- Layers 2 & 3 on the MXU (bf16 inputs, f32 accumulation / bias / tanh).
    h2 = jnp.tanh(
        jnp.dot(h1.astype(mxu_dtype), w2_ref[...],
                preferred_element_type=jnp.float32)
        + b2_ref[...]
    )
    out = (
        jnp.dot(h2.astype(mxu_dtype), w3_ref[...],
                preferred_element_type=jnp.float32)
        + b3_ref[...]
    )                                                         # (T, 128) f32

    # Narrow store: only the real (padded-to-8) output columns go to HBM.
    o_ref[...] = out[:, :out_cols].astype(o_ref.dtype)


def _round_up(x, m):
    return ((x + m - 1) // m) * m


def _vmem_limit_bytes(block_eff, hidden_dim, mxu_bytes):
    """Rough per-tile footprint (lane-padded) with 2x headroom, clamped for v7x."""
    lane_row = 128 * 4                       # one f32 row padded to a full lane tile
    per_row = (
        2 * lane_row                         # x tile, double-buffered (lane-padded)
        + 2 * lane_row                       # out tile, double-buffered (lane-padded)
        + 3 * hidden_dim * 4                 # h1, h2, layer-3 result (f32)
        + 2 * hidden_dim * mxu_bytes         # bf16 casts of h1, h2
    )
    weights = 2 * (4 + 2 * hidden_dim) * hidden_dim * 4   # generous, double-buffered
    est = block_eff * per_row + weights
    return int(min(max(2 * est, 16 * 1024 * 1024), 56 * 1024 * 1024))


@functools.partial(jax.jit, static_argnames=("block_b", "use_bf16"))
def nn_forces_forward(x, w1, b1, w2, b2, w3, b3, *, block_b=4096, use_bf16=True):
    """Pallas implementation of NNForces.forward.

    x:  (B, input_dim) float32
    w1: (input_dim, hidden_dim),  b1: (1, hidden_dim)
    w2: (hidden_dim, hidden_dim), b2: (1, hidden_dim)
    w3: (hidden_dim, output_dim), b3: (1, output_dim)
    returns (B, output_dim) float32
    """
    B, input_dim = x.shape
    hidden_dim = w1.shape[1]
    output_dim = w3.shape[1]

    # --- output padding: narrow store columns (mult. of 8) + 128-lane matmul width
    out_cols = _round_up(output_dim, 8)
    w3_lanes = _round_up(out_cols, 128)
    w3p = jnp.pad(w3, ((0, 0), (0, w3_lanes - output_dim)))
    b3p = jnp.pad(b3, ((0, 0), (0, w3_lanes - output_dim)))

    # --- batch tiling: 8-aligned tile, cap at ~half the batch so grid >= 2 (megacore)
    b_pad8 = _round_up(max(B, 1), 8)
    half = _round_up(-(-b_pad8 // 2), 8)
    block_eff = min(_round_up(block_b, 8), b_pad8, max(half, 8))
    grid_b = -(-b_pad8 // block_eff)
    B_pad = grid_b * block_eff
    x_p = jnp.pad(x, ((0, B_pad - B), (0, 0)))

    # --- dtypes: bf16 MXU inputs for layers 2/3; layer-1 weights + biases stay f32
    mxu_dtype = jnp.bfloat16 if use_bf16 else jnp.float32
    mxu_bytes = jnp.dtype(mxu_dtype).itemsize
    w1c = w1.astype(jnp.float32)          # layer 1 runs on the VPU in f32
    w2c = w2.astype(mxu_dtype)
    w3c = w3p.astype(mxu_dtype)
    b1c = b1.astype(jnp.float32)
    b2c = b2.astype(jnp.float32)
    b3c = b3p.astype(jnp.float32)

    # Batch dim tiled across the grid; weights/biases are tiny and VMEM-resident
    # (same block index every step).
    in_specs = [
        pl.BlockSpec((block_eff, input_dim), lambda i: (i, 0)),    # x tile
        pl.BlockSpec((input_dim, hidden_dim), lambda i: (0, 0)),   # W1 (f32, VPU)
        pl.BlockSpec((1, hidden_dim), lambda i: (0, 0)),           # b1
        pl.BlockSpec((hidden_dim, hidden_dim), lambda i: (0, 0)),  # W2
        pl.BlockSpec((1, hidden_dim), lambda i: (0, 0)),           # b2
        pl.BlockSpec((hidden_dim, w3_lanes), lambda i: (0, 0)),    # W3 (lane-padded)
        pl.BlockSpec((1, w3_lanes), lambda i: (0, 0)),             # b3 (lane-padded)
    ]
    out_specs = pl.BlockSpec((block_eff, out_cols), lambda i: (i, 0))

    flops = 2 * B_pad * (
        input_dim * hidden_dim + hidden_dim * hidden_dim + hidden_dim * w3_lanes
    )
    bytes_accessed = (
        B_pad * input_dim * 4                                   # x
        + input_dim * hidden_dim * 4                            # W1
        + hidden_dim * hidden_dim * mxu_bytes                   # W2
        + hidden_dim * w3_lanes * mxu_bytes                     # W3
        + (2 * hidden_dim + w3_lanes) * 4                       # biases
        + B_pad * out_cols * 4                                  # output (narrow)
    )
    cost = pl.CostEstimate(
        flops=flops,
        transcendentals=2 * B_pad * hidden_dim,
        bytes_accessed=bytes_accessed,
    )

    out_full = pl.pallas_call(
        _mlp_kernel,
        out_shape=jax.ShapeDtypeStruct((B_pad, out_cols), x.dtype),
        grid_spec=pltpu.PrefetchScalarGridSpec(
            num_scalar_prefetch=0,
            grid=(grid_b,),
            in_specs=in_specs,
            out_specs=out_specs,
        ),
        compiler_params=pltpu.CompilerParams(
            dimension_semantics=("parallel",),
            vmem_limit_bytes=_vmem_limit_bytes(block_eff, hidden_dim, mxu_bytes),
        ),
        cost_estimate=cost,
    )(x_p, w1c, b1c, w2c, b2c, w3c, b3c)

    return out_full[:B, :output_dim]


def init_params(key, input_dim=4, hidden_dim=128, output_dim=2):
    """Deterministic init mimicking nn.Linear's U(-1/sqrt(fan_in), 1/sqrt(fan_in))."""
    ks = jax.random.split(key, 6)

    def linear(kw, kb, fan_in, fan_out):
        bound = 1.0 / jnp.sqrt(jnp.float32(fan_in))
        w = jax.random.uniform(kw, (fan_in, fan_out), jnp.float32, -bound, bound)
        b = jax.random.uniform(kb, (1, fan_out), jnp.float32, -bound, bound)
        return w, b

    w1, b1 = linear(ks[0], ks[1], input_dim, hidden_dim)
    w2, b2 = linear(ks[2], ks[3], hidden_dim, hidden_dim)
    w3, b3 = linear(ks[4], ks[5], hidden_dim, output_dim)
    return w1, b1, w2, b2, w3, b3


def reference_forward(x, w1, b1, w2, b2, w3, b3):
    h1 = jnp.tanh(x @ w1 + b1)
    h2 = jnp.tanh(h1 @ w2 + b2)
    return h2 @ w3 + b3


if __name__ == "__main__":
    key = jax.random.PRNGKey(0)
    k_params, k_x1, k_x2 = jax.random.split(key, 3)

    input_dim, hidden_dim, output_dim = 4, 128, 2
    params = init_params(k_params, input_dim, hidden_dim, output_dim)

    # Case 1: small batch, f32 debug path -> tight check vs. JAX reference.
    x_small = jax.random.normal(k_x1, (8, input_dim), jnp.float32)
    out_f32 = jax.block_until_ready(
        nn_forces_forward(x_small, *params, use_bf16=False)
    )
    ref_small = reference_forward(x_small, *params)
    assert out_f32.shape == (8, output_dim), out_f32.shape
    assert jnp.allclose(out_f32, ref_small, atol=1e-5, rtol=1e-5), "f32 mismatch"

    # Case 2: odd batch size (exercises padding, cdiv grid, 2-step megacore grid,
    # narrow output store), default bf16 MXU path.
    x_odd = jax.random.normal(k_x2, (37, input_dim), jnp.float32)
    out_bf16 = jax.block_until_ready(nn_forces_forward(x_odd, *params))
    ref_odd = reference_forward(x_odd, *params)
    assert out_bf16.shape == (37, output_dim), out_bf16.shape
    assert jnp.allclose(out_bf16, ref_odd, atol=2e-2, rtol=2e-2), "bf16 mismatch"

    print("KERNEL_OK")
</pallas_src>

<mosaic_0001>
module attributes {stable_mosaic.version = 11 : i64} {
  func.func @_mlp_kernel(%arg0: i32, %arg1: memref<8x4xf32, #tpu.memory_space<vmem>>, %arg2: memref<4x128xf32, #tpu.memory_space<vmem>>, %arg3: memref<1x128xf32, #tpu.memory_space<vmem>>, %arg4: memref<128x128xf32, #tpu.memory_space<vmem>>, %arg5: memref<1x128xf32, #tpu.memory_space<vmem>>, %arg6: memref<128x128xf32, #tpu.memory_space<vmem>>, %arg7: memref<1x128xf32, #tpu.memory_space<vmem>>, %arg8: memref<8x8xf32, #tpu.memory_space<vmem>>) attributes {dimension_semantics = [#tpu.dimension_semantics<parallel>], iteration_bounds = array<i64: 1>, scalar_prefetch = 0 : i64, scratch_operands = 0 : i64, tpu.core_type = #tpu.core_type<tc>, window_params = [{transform_indices = @transform_0, window_bounds = array<i64: 8, 4>}, {pipeline_mode = #tpu.pipeline_mode<synchronous>, transform_indices = @transform_1, window_bounds = array<i64: 4, 128>}, {pipeline_mode = #tpu.pipeline_mode<synchronous>, transform_indices = @transform_2, window_bounds = array<i64: 1, 128>}, {pipeline_mode = #tpu.pipeline_mode<synchronous>, transform_indices = @transform_3, window_bounds = array<i64: 128, 128>}, {pipeline_mode = #tpu.pipeline_mode<synchronous>, transform_indices = @transform_4, window_bounds = array<i64: 1, 128>}, {pipeline_mode = #tpu.pipeline_mode<synchronous>, transform_indices = @transform_5, window_bounds = array<i64: 128, 128>}, {pipeline_mode = #tpu.pipeline_mode<synchronous>, transform_indices = @transform_6, window_bounds = array<i64: 1, 128>}, {transform_indices = @transform_7, window_bounds = array<i64: 8, 8>}]} {
    %c0 = arith.constant 0 : index
    %c0_0 = arith.constant 0 : index
    %0 = vector.load %arg1[%c0, %c0_0] : memref<8x4xf32, #tpu.memory_space<vmem>>, vector<8x4xf32>
    %c0_1 = arith.constant 0 : index
    %c0_2 = arith.constant 0 : index
    %1 = vector.load %arg3[%c0_1, %c0_2] : memref<1x128xf32, #tpu.memory_space<vmem>>, vector<1x128xf32>
    %2 = vector.extract_strided_slice %0 {offsets = [0, 0], sizes = [8, 1], strides = [1, 1]} : vector<8x4xf32> to vector<8x1xf32>
    %c0_3 = arith.constant 0 : index
    %c0_4 = arith.constant 0 : index
    %3 = vector.load %arg2[%c0_3, %c0_4] : memref<4x128xf32, #tpu.memory_space<vmem>>, vector<1x128xf32>
    %4 = vector.broadcast %2 : vector<8x1xf32> to vector<8x128xf32>
    %5 = vector.broadcast %3 : vector<1x128xf32> to vector<8x128xf32>
    %6 = arith.mulf %4, %5 : vector<8x128xf32>
    %7 = vector.broadcast %1 : vector<1x128xf32> to vector<8x128xf32>
    %8 = arith.addf %7, %6 : vector<8x128xf32>
    %9 = vector.extract_strided_slice %0 {offsets = [0, 1], sizes = [8, 1], strides = [1, 1]} : vector<8x4xf32> to vector<8x1xf32>
    %c1 = arith.constant 1 : index
    %c0_5 = arith.constant 0 : index
    %10 = vector.load %arg2[%c1, %c0_5] : memref<4x128xf32, #tpu.memory_space<vmem>>, vector<1x128xf32>
    %11 = vector.broadcast %9 : vector<8x1xf32> to vector<8x128xf32>
    %12 = vector.broadcast %10 : vector<1x128xf32> to vector<8x128xf32>
    %13 = arith.mulf %11, %12 : vector<8x128xf32>
    %14 = arith.addf %8, %13 : vector<8x128xf32>
    %15 = vector.extract_strided_slice %0 {offsets = [0, 2], sizes = [8, 1], strides = [1, 1]} : vector<8x4xf32> to vector<8x1xf32>
    %c2 = arith.constant 2 : index
    %c0_6 = arith.constant 0 : index
    %16 = vector.load %arg2[%c2, %c0_6] : memref<4x128xf32, #tpu.memory_space<vmem>>, vector<1x128xf32>
    %17 = vector.broadcast %15 : vector<8x1xf32> to vector<8x128xf32>
    %18 = vector.broadcast %16 : vector<1x128xf32> to vector<8x128xf32>
    %19 = arith.mulf %17, %18 : vector<8x128xf32>
    %20 = arith.addf %14, %19 : vector<8x128xf32>
    %21 = vector.extract_strided_slice %0 {offsets = [0, 3], sizes = [8, 1], strides = [1, 1]} : vector<8x4xf32> to vector<8x1xf32>
    %c3 = arith.constant 3 : index
    %c0_7 = arith.constant 0 : index
    %22 = vector.load %arg2[%c3, %c0_7] : memref<4x128xf32, #tpu.memory_space<vmem>>, vector<1x128xf32>
    %23 = vector.broadcast %21 : vector<8x1xf32> to vector<8x128xf32>
    %24 = vector.broadcast %22 : vector<1x128xf32> to vector<8x128xf32>
    %25 = arith.mulf %23, %24 : vector<8x128xf32>
    %26 = arith.addf %20, %25 : vector<8x128xf32>
    %27 = math.tanh %26 : vector<8x128xf32>
    %c0_8 = arith.constant 0 : index
    %c0_9 = arith.constant 0 : index
    %28 = vector.load %arg4[%c0_8, %c0_9] : memref<128x128xf32, #tpu.memory_space<vmem>>, vector<128x128xf32>
    %cst = arith.constant dense<0.000000e+00> : vector<8x128xf32>
    %29 = tpu.matmul %27, %28, %cst {dimension_numbers = #tpu.dot_dimension_numbers<[1], [0], [0], [1], [0, 0, 1, 1], [], []>} : vector<8x128xf32>, vector<128x128xf32>, vector<8x128xf32> -> vector<8x128xf32>
    %c0_10 = arith.constant 0 : index
    %c0_11 = arith.constant 0 : index
    %30 = vector.load %arg5[%c0_10, %c0_11] : memref<1x128xf32, #tpu.memory_space<vmem>>, vector<1x128xf32>
    %31 = vector.broadcast %30 : vector<1x128xf32> to vector<8x128xf32>
    %32 = arith.addf %29, %31 : vector<8x128xf32>
    %33 = math.tanh %32 : vector<8x128xf32>
    %c0_12 = arith.constant 0 : index
    %c0_13 = arith.constant 0 : index
    %34 = vector.load %arg6[%c0_12, %c0_13] : memref<128x128xf32, #tpu.memory_space<vmem>>, vector<128x128xf32>
    %cst_14 = arith.constant dense<0.000000e+00> : vector<8x128xf32>
    %35 = tpu.matmul %33, %34, %cst_14 {dimension_numbers = #tpu.dot_dimension_numbers<[1], [0], [0], [1], [0, 0, 1, 1], [], []>} : vector<8x128xf32>, vector<128x128xf32>, vector<8x128xf32> -> vector<8x128xf32>
    %c0_15 = arith.constant 0 : index
    %c0_16 = arith.constant 0 : index
    %36 = vector.load %arg7[%c0_15, %c0_16] : memref<1x128xf32, #tpu.memory_space<vmem>>, vector<1x128xf32>
    %37 = vector.broadcast %36 : vector<1x128xf32> to vector<8x128xf32>
    %38 = arith.addf %35, %37 : vector<8x128xf32>
    %39 = vector.extract_strided_slice %38 {offsets = [0, 0], sizes = [8, 8], strides = [1, 1]} : vector<8x128xf32> to vector<8x8xf32>
    %c0_17 = arith.constant 0 : index
    %c0_18 = arith.constant 0 : index
    %40 = vector.load %arg8[%c0_17, %c0_18] : memref<8x8xf32, #tpu.memory_space<vmem>>, vector<8x8xf32>
    tpu.vector_store %arg8[%c0_17, %c0_18], %39 {strides = array<i32>} : memref<8x8xf32, #tpu.memory_space<vmem>>, vector<8x8xf32>,
    return
  }
  func.func @transform_0(%arg0: i32) -> (i32, i32) {
    %c0_i32 = arith.constant 0 : i32
    %c0_i32_0 = arith.constant 0 : i32
    return %arg0, %c0_i32 : i32, i32
  }
  func.func @transform_1(%arg0: i32) -> (i32, i32) {
    %c0_i32 = arith.constant 0 : i32
    %c0_i32_0 = arith.constant 0 : i32
    %c0_i32_1 = arith.constant 0 : i32
    return %c0_i32, %c0_i32_0 : i32, i32
  }
  func.func @transform_2(%arg0: i32) -> (i32, i32) {
    %c0_i32 = arith.constant 0 : i32
    %c0_i32_0 = arith.constant 0 : i32
    %c0_i32_1 = arith.constant 0 : i32
    return %c0_i32, %c0_i32_0 : i32, i32
  }
  func.func @transform_3(%arg0: i32) -> (i32, i32) {
    %c0_i32 = arith.constant 0 : i32
    %c0_i32_0 = arith.constant 0 : i32
    %c0_i32_1 = arith.constant 0 : i32
    return %c0_i32, %c0_i32_0 : i32, i32
  }
  func.func @transform_4(%arg0: i32) -> (i32, i32) {
    %c0_i32 = arith.constant 0 : i32
    %c0_i32_0 = arith.constant 0 : i32
    %c0_i32_1 = arith.constant 0 : i32
    return %c0_i32, %c0_i32_0 : i32, i32
  }
  func.func @transform_5(%arg0: i32) -> (i32, i32) {
    %c0_i32 = arith.constant 0 : i32
    %c0_i32_0 = arith.constant 0 : i32
    %c0_i32_1 = arith.constant 0 : i32
    return %c0_i32, %c0_i32_0 : i32, i32
  }
  func.func @transform_6(%arg0: i32) -> (i32, i32) {
    %c0_i32 = arith.constant 0 : i32
    %c0_i32_0 = arith.constant 0 : i32
    %c0_i32_1 = arith.constant 0 : i32
    return %c0_i32, %c0_i32_0 : i32, i32
  }
  func.func @transform_7(%arg0: i32) -> (i32, i32) {
    %c0_i32 = arith.constant 0 : i32
    %c0_i32_0 = arith.constant 0 : i32
    return %arg0, %c0_i32 : i32, i32
  }
}

</mosaic_0001>

<llo_original>
// kernel: nn_forces_forward.1
$region0: #{nn_forces_forward.1}
  #allocation0 [shape = 'u32[]', space=smem, size = 0x4, offset = 0x4, fixed_abs, tag = 'smem constant byte address 0x4 - core index']
  #allocation1 [shape = 'u32[72,128]{1,0:T(1,128)}', space=vmem, size = 0x9000, scoped, tag = 'internal scratch']
  %s0 = inlined_call_operand.vmem [shape: f32[8,4], index: 0, kind: input, shape index: {}]
  %s1 = inlined_call_operand.vmem [shape: f32[4,128], index: 1, kind: input, shape index: {}]
  %s2 = inlined_call_operand.vmem [shape: f32[1,128], index: 2, kind: input, shape index: {}]
  %s3 = inlined_call_operand.vmem [shape: f32[128,128], index: 3, kind: input, shape index: {}]
  %s4 = inlined_call_operand.vmem [shape: f32[1,128], index: 4, kind: input, shape index: {}]
  %s5 = inlined_call_operand.vmem [shape: f32[128,128], index: 5, kind: input, shape index: {}]
  %s6 = inlined_call_operand.vmem [shape: f32[1,128], index: 6, kind: input, shape index: {}]
  %s7 = inlined_call_operand.vmem [shape: f32[8,8], index: 7, kind: output, shape index: {}]
  %s8 = sld [smem:[#allocation0]]
  $region38: #{nn_forces_forward.1} parent=0
    _
  %s10 = ssub.s32 1, %s8
  %s11 = scalar_select 0, %s10, %s8
  // Predicated region
  $region2: #{nn_forces_forward.1} parent=0 // pred_check
    _
  $region3: #{nn_forces_forward.1} parent=0 // pred_check_branch
    %13 = sbr.rel (0) target = $region5
  $region4: #{nn_forces_forward.1} parent=0 // pred_region
    _
  $region5: #{nn_forces_forward.1} parent=0 // pred_fallthru
    _
  // Predicated region
  $region6: #{nn_forces_forward.1} parent=0 // pred_check
    _
  $region7: #{nn_forces_forward.1} parent=0 // pred_check_branch
    %15 = sbr.rel (0) target = $region9
  $region8: #{nn_forces_forward.1} parent=0 // pred_region
    _
  $region9: #{nn_forces_forward.1} parent=0 // pred_fallthru
    _
  // Predicated region
  $region10: #{nn_forces_forward.1} parent=0 // pred_check
    _
  $region11: #{nn_forces_forward.1} parent=0 // pred_check_branch
    %17 = sbr.rel (0) target = $region13
  $region12: #{nn_forces_forward.1} parent=0 // pred_region
    _
  $region13: #{nn_forces_forward.1} parent=0 // pred_fallthru
    _
  // Predicated region
  $region14: #{nn_forces_forward.1} parent=0 // pred_check
    _
  $region15: #{nn_forces_forward.1} parent=0 // pred_check_branch
    %19 = sbr.rel (0) target = $region17
  $region16: #{nn_forces_forward.1} parent=0 // pred_region
    _
  $region17: #{nn_forces_forward.1} parent=0 // pred_fallthru
    _
  // Predicated region
  $region18: #{nn_forces_forward.1} parent=0 // pred_check
    _
  $region19: #{nn_forces_forward.1} parent=0 // pred_check_branch
    %21 = sbr.rel (0) target = $region21
  $region20: #{nn_forces_forward.1} parent=0 // pred_region
    _
  $region21: #{nn_forces_forward.1} parent=0 // pred_fallthru
    _
  // Predicated region
  $region22: #{nn_forces_forward.1} parent=0 // pred_check
    _
  $region23: #{nn_forces_forward.1} parent=0 // pred_check_branch
    %23 = sbr.rel (0) target = $region25
  $region24: #{nn_forces_forward.1} parent=0 // pred_region
    _
  $region25: #{nn_forces_forward.1} parent=0 // pred_fallthru
    _
  // Predicated region
  $region26: #{nn_forces_forward.1} parent=0 // pred_check
    _
  $region27: #{nn_forces_forward.1} parent=0 // pred_check_branch
    %25 = sbr.rel (0) target = $region29
  $region28: #{nn_forces_forward.1} parent=0 // pred_region
    _
  $region29: #{nn_forces_forward.1} parent=0 // pred_fallthru
    _
  %v26 = vld [vmem:[%s0] sm:$0xff]
  %v27 = vld [vmem:[%s2] sm:$0x1]
  %v28 = vld [vmem:[%s1] sm:$0x1]
  %30 = vset.pattern.permute.xlu0 0
  %31 = vperm.xlu0 %30, %v26
  %v32 = vpop.permute.xlu0 %31
  %v34 = vperm.slane %v28, 0
  %v35 = vmul.f32 %v32, %v34
  %v37 = vperm.slane %v27, 0
  %v39 = vadd.f32 %v37, %v35
  %v40 = vld [vmem:[%s1 + $0x1] sm:$0x1]
  %41 = vset.pattern.permute.xlu0 1
  %42 = vperm.xlu0 %41, %v26
  %v43 = vpop.permute.xlu0 %42
  %v45 = vperm.slane %v40, 0
  %v46 = vmul.f32 %v43, %v45
  %v47 = vadd.f32 %v39, %v46
  %v48 = vld [vmem:[%s1 + $0x2] sm:$0x1]
  %49 = vset.pattern.permute.xlu0 2
  %50 = vperm.xlu0 %49, %v26
  %v51 = vpop.permute.xlu0 %50
  %v53 = vperm.slane %v48, 0
  %v54 = vmul.f32 %v51, %v53
  %v55 = vadd.f32 %v47, %v54
  %v56 = vld [vmem:[%s1 + $0x3] sm:$0x1]
  %57 = vset.pattern.permute.xlu0 3
  %58 = vperm.xlu0 %57, %v26
  %v59 = vpop.permute.xlu0 %58
  %v61 = vperm.slane %v56, 0
  %v62 = vmul.f32 %v59, %v61
  %v63 = vadd.f32 %v55, %v62
  %v64 = vtanh.pop %v63
  %v65 = vld [vmem:[%s3] sm:$0xff]
  %v66 = vld [vmem:[%s3 + $0x8] sm:$0xff]
  %v67 = vld [vmem:[%s3 + $0x10] sm:$0xff]
  %v68 = vld [vmem:[%s3 + $0x18] sm:$0xff]
  %v69 = vld [vmem:[%s3 + $0x20] sm:$0xff]
  %v70 = vld [vmem:[%s3 + $0x28] sm:$0xff]
  %v71 = vld [vmem:[%s3 + $0x30] sm:$0xff]
  %v72 = vld [vmem:[%s3 + $0x38] sm:$0xff]
  %v73 = vld [vmem:[%s3 + $0x40] sm:$0xff]
  %v74 = vld [vmem:[%s3 + $0x48] sm:$0xff]
  %v75 = vld [vmem:[%s3 + $0x50] sm:$0xff]
  %v76 = vld [vmem:[%s3 + $0x58] sm:$0xff]
  %v77 = vld [vmem:[%s3 + $0x60] sm:$0xff]
  %v78 = vld [vmem:[%s3 + $0x68] sm:$0xff]
  %v79 = vld [vmem:[%s3 + $0x70] sm:$0xff]
  %v80 = vld [vmem:[%s3 + $0x78] sm:$0xff]
  %v81 = vld [vmem:[%s4] sm:$0x1]
  %v83 = vperm.slane %v81, 0
  %85 = vmatpush.msra.mxu0 %v80
  %86 = vmatpush.msra.mxu0 %v79
  %87 = vmatpush.msra.mxu0 %v78
  %88 = vmatpush.msra.mxu0 %v77
  %89 = vmatpush.msra.mxu0 %v76
  %90 = vmatpush.msra.mxu0 %v75
  %91 = vmatpush.msra.mxu0 %v74
  %92 = vmatpush.msra.mxu0 %v73
  %93 = vmatpush.msra.mxu0 %v72
  %94 = vmatpush.msra.mxu0 %v71
  %95 = vmatpush.msra.mxu0 %v70
  %96 = vmatpush.msra.mxu0 %v69
  %97 = vmatpush.msra.mxu0 %v68
  %98 = vmatpush.msra.mxu0 %v67
  %99 = vmatpush.msra.mxu0 %v66
  %100 = vmatpush.msra.mxu0 %v65
  %101 = vmatmul.f32.gmra.mxu0 %v64
  %v102 = vpop.f32.mrf.mxu0
  %v103 = vadd.f32 %v83, %v102
  %104 = vdwg.mxu0
  %v105 = vtanh.pop %v103
  %v106 = vld [vmem:[%s5] sm:$0xff]
  %v107 = vld [vmem:[%s5 + $0x8] sm:$0xff]
  %v108 = vld [vmem:[%s5 + $0x10] sm:$0xff]
  %v109 = vld [vmem:[%s5 + $0x18] sm:$0xff]
  %v110 = vld [vmem:[%s5 + $0x20] sm:$0xff]
  %v111 = vld [vmem:[%s5 + $0x28] sm:$0xff]
  %v112 = vld [vmem:[%s5 + $0x30] sm:$0xff]
  %v113 = vld [vmem:[%s5 + $0x38] sm:$0xff]
  %v114 = vld [vmem:[%s5 + $0x40] sm:$0xff]
  %v115 = vld [vmem:[%s5 + $0x48] sm:$0xff]
  %v116 = vld [vmem:[%s5 + $0x50] sm:$0xff]
  %v117 = vld [vmem:[%s5 + $0x58] sm:$0xff]
  %v118 = vld [vmem:[%s5 + $0x60] sm:$0xff]
  %v119 = vld [vmem:[%s5 + $0x68] sm:$0xff]
  %v120 = vld [vmem:[%s5 + $0x70] sm:$0xff]
  %v121 = vld [vmem:[%s5 + $0x78] sm:$0xff]
  %v122 = vld [vmem:[%s6] sm:$0x1]
  %v124 = vperm.slane %v122, 0
  %126 = vmatpush.msra.mxu0 %v121
  %127 = vmatpush.msra.mxu0 %v120
  %128 = vmatpush.msra.mxu0 %v119
  %129 = vmatpush.msra.mxu0 %v118
  %130 = vmatpush.msra.mxu0 %v117
  %131 = vmatpush.msra.mxu0 %v116
  %132 = vmatpush.msra.mxu0 %v115
  %133 = vmatpush.msra.mxu0 %v114
  %134 = vmatpush.msra.mxu0 %v113
  %135 = vmatpush.msra.mxu0 %v112
  %136 = vmatpush.msra.mxu0 %v111
  %137 = vmatpush.msra.mxu0 %v110
  %138 = vmatpush.msra.mxu0 %v109
  %139 = vmatpush.msra.mxu0 %v108
  %140 = vmatpush.msra.mxu0 %v107
  %141 = vmatpush.msra.mxu0 %v106
  %142 = vmatmul.f32.gmra.mxu0 %v105
  %v143 = vpop.f32.mrf.mxu0
  %v144 = vadd.f32 %v124, %v143
  %145 = vdwg.mxu0
  %vm146 = vcmask 64512
  %147 = vst.msk [vmem:[%s7] sm:$0xff] %vm146, %v144
  // Predicated region
  $region30: #{nn_forces_forward.1} parent=0 // pred_check
    _
  $region31: #{nn_forces_forward.1} parent=0 // pred_check_branch
    %149 = sbr.rel (0) target = $region33
  $region32: #{nn_forces_forward.1} parent=0 // pred_region
    _
  $region33: #{nn_forces_forward.1} parent=0 // pred_fallthru
    _
  // Predicated region
  $region34: #{nn_forces_forward.1} parent=0 // pred_check
    _
  $region35: #{nn_forces_forward.1} parent=0 // pred_check_branch
    %151 = sbr.rel (0) target = $region37
  $region36: #{nn_forces_forward.1} parent=0 // pred_region
    _
  $region37: #{nn_forces_forward.1} parent=0 // pred_fallthru
    _

</llo_original>
